<compile_context>
chip_gen: v6e
topology: v6e:2x2x1
jax: 0.10.0
libtpu: 0.0.40
codegen_flags: <defaults>
</compile_context>

<pallas_src>
import jax
import jax.numpy as jnp
from jax import lax
from jax.experimental import pallas as pl
from jax.experimental.pallas import tpu as pltpu

_LANES = 128
_SUBLANES = 8
_TARGET_TILE_BYTES = 8 * 1024 * 1024      # per-buffer working-set target per tile
_VMEM_LIMIT_BYTES = 48 * 1024 * 1024      # < 64 MiB/TC (v7x); ample on v5e/v6e
_LABEL_VMEM_ROW_BYTES = 512               # VMEM footprint of one lane-sparse (1,) i32 label row


def _count_hits_kernel(pred_ref, lab_ref, out_ref):
    """Per-tile count of rows whose first-index argmax equals the label.

    pred_ref: (TILE_N, C) in the input dtype (no up-cast)
    lab_ref : (TILE_N, 1) int32 labels (padded rows carry -1 -> never hit)
    out_ref : (1, 1, 128) float32 -- hit count in lane 0, zeros elsewhere
    """
    pred = pred_ref[...]
    if jnp.issubdtype(pred.dtype, jnp.floating):
        # torch.max treats NaN as maximal (returns the first NaN position);
        # pred == max would otherwise never match a NaN row. Residual
        # divergence only for rows mixing +inf and NaN.
        pred = jnp.where(jnp.isnan(pred), jnp.asarray(jnp.inf, pred.dtype), pred)
    tn, c = pred.shape

    # First-index-of-max argmax (torch.max tie-breaking). Equality against the
    # row max is exact in any dtype, so no up-cast is needed.
    max_val = jnp.max(pred, axis=-1, keepdims=True)                  # (TILE_N, 1)
    col_ids = lax.broadcasted_iota(jnp.int32, (1, c), 1)             # (1, C), bcast over rows
    idx = jnp.min(jnp.where(pred == max_val, col_ids, jnp.int32(c)),
                  axis=-1, keepdims=True)                            # (TILE_N, 1) int32

    # Padded labels are -1 and idx is in [0, C], so padded / garbage rows never
    # count. No tail mask, no program_id check on the hot path.
    hits = jnp.sum((idx == lab_ref[...]).astype(jnp.float32))

    # Lane-dense per-tile partial: count in lane 0, zeros elsewhere, so the
    # wrapper can do a dense jnp.sum over all partials.
    lane = lax.broadcasted_iota(jnp.int32, (1, 1, _LANES), 2)
    out_ref[...] = jnp.where(lane == 0, hits, jnp.float32(0.0))


def _choose_tile_rows(n_rows, c, itemsize):
    """Byte-driven tile size: ~8 MiB working set per buffered tile, >= 2 tiles."""
    # The lane-sparse (row, 1) int32 label occupies a full 512-B VMEM row, so
    # budget it alongside the pred row when sizing the tile.
    eff_row_bytes = c * itemsize + _LABEL_VMEM_ROW_BYTES
    t = max(_SUBLANES, (_TARGET_TILE_BYTES // eff_row_bytes) // _SUBLANES * _SUBLANES)
    # Keep num_tiles >= 2 so the "parallel" grid axis can use both TensorCores
    # on v7x (negligible cost elsewhere).
    half = -(-n_rows // 2)
    half = max(_SUBLANES, -(-half // _SUBLANES) * _SUBLANES)
    return int(min(t, half))


def _xla_fallback(y_pred, y_true, reduction, correct):
    hit = (jnp.argmax(y_pred, axis=-1) == y_true).astype(jnp.float32)
    loss = hit if correct else 1.0 - hit
    if reduction == "mean":
        return jnp.mean(loss)
    if reduction == "sum":
        return jnp.sum(loss)
    return loss  # PyTorch module returns the per-element loss for other reductions


def zero_one_loss(y_pred, y_true, *, reduction="mean", correct=False, ignore_index=-100):
    """Pallas-TPU ZeroOneLoss. y_pred: (..., C) float; y_true: (...) integer labels.

    `ignore_index` is accepted for API parity with the PyTorch module, which
    stores it but never uses it in forward.
    """
    del ignore_index
    c = y_pred.shape[-1]
    n = 1
    for d in y_pred.shape[:-1]:
        n *= int(d)
    row_bytes = c * y_pred.dtype.itemsize

    # Regimes where the row-tiled kernel is not worthwhile / not supported:
    #  - C < 128: lane utilization C/128; XLA's fused argmax wins.
    #    TODO(synk): lane-fold 128//C rows with a segmented max/first-index reduce.
    #  - huge C: a single 8-row tile would blow VMEM (needs a class-axis grid).
    #  - reduction='none': per-element loss tensor (different output layout).
    if (c < _LANES or n == 0 or reduction not in ("mean", "sum")
            or 2 * _SUBLANES * row_bytes > _VMEM_LIMIT_BYTES // 2):
        return _xla_fallback(y_pred, y_true, reduction, correct)

    pred2d = y_pred.reshape(-1, c)                      # keep input dtype (bf16 stays bf16)
    true2d = y_true.astype(jnp.int32).reshape(-1, 1)

    tile_n = _choose_tile_rows(n, c, pred2d.dtype.itemsize)
    num_tiles = int(pl.cdiv(n, tile_n))
    n_pad = num_tiles * tile_n

    # Pad only the (tiny) label column with -1 so padded / out-of-bounds pred
    # rows of the last partial block can never register a hit. The big pred
    # array is NOT padded (no extra HBM round trip).
    if n_pad != n:
        true2d = jnp.pad(true2d, ((0, n_pad - n), (0, 0)), constant_values=-1)

    partials = pl.pallas_call(
        _count_hits_kernel,
        out_shape=jax.ShapeDtypeStruct((num_tiles, 1, _LANES), jnp.float32),
        grid=(num_tiles,),
        in_specs=[
            pl.BlockSpec((tile_n, c), lambda i: (i, 0)),
            pl.BlockSpec((tile_n, 1), lambda i: (i, 0)),
        ],
        out_specs=pl.BlockSpec((1, 1, _LANES), lambda i: (i, 0, 0)),
        compiler_params=pltpu.CompilerParams(
            dimension_semantics=("parallel",),
            vmem_limit_bytes=_VMEM_LIMIT_BYTES,
        ),
        cost_estimate=pl.CostEstimate(
            flops=5 * n * c,
            transcendentals=0,
            bytes_accessed=n * c * pred2d.dtype.itemsize
            + n_pad * 4
            + num_tiles * _LANES * 4,
        ),
    )(pred2d, true2d)

    hits = jnp.sum(partials)                             # dense read, lane 0 carries the count
    count = hits if correct else jnp.float32(n) - hits   # correct / incorrect count over real rows
    if reduction == "mean":
        return count / jnp.float32(n)
    return count                                         # reduction == "sum"


def _reference(y_pred, y_true, correct=False):
    hit = (jnp.argmax(y_pred, axis=-1) == y_true).astype(jnp.float32)
    loss = hit if correct else 1.0 - hit
    return jnp.mean(loss)


if __name__ == "__main__":
    key = jax.random.PRNGKey(0)
    k1, k2, k3, k4, k5, k6 = jax.random.split(key, 6)

    # Primary demo: (batch, seq, num_classes) logits with C >= 128 so the
    # Pallas path (not the small-C fallback) is exercised.
    batch, seq, num_classes = 2, 8, 256
    y_pred = jax.random.normal(k1, (batch, seq, num_classes), dtype=jnp.float32)
    y_true = jax.random.randint(k2, (batch, seq), 0, num_classes, dtype=jnp.int32)

    loss = jax.block_until_ready(zero_one_loss(y_pred, y_true))
    ref = _reference(y_pred, y_true)
    assert jnp.allclose(loss, ref), (loss, ref)

    # correct=True + reduction='sum' (same compiled kernel, different wrapper math).
    s = jax.block_until_ready(zero_one_loss(y_pred, y_true, reduction="sum", correct=True))
    s_ref = jnp.sum((jnp.argmax(y_pred, axis=-1) == y_true).astype(jnp.float32))
    assert jnp.allclose(s, s_ref), (s, s_ref)

    # Ragged N (not a multiple of the tile / sublane) -> exercises the partial
    # last pred block + padded-label path.
    b2, s2, c2 = 3, 5, 128
    y_pred2 = jax.random.normal(k3, (b2, s2, c2), dtype=jnp.float32)
    y_true2 = jax.random.randint(k4, (b2, s2), 0, c2, dtype=jnp.int32)
    loss2 = jax.block_until_ready(zero_one_loss(y_pred2, y_true2))
    ref2 = _reference(y_pred2, y_true2)
    assert jnp.allclose(loss2, ref2), (loss2, ref2)

    # Small-C regime routes to the XLA fallback (documented design choice).
    b3, s3, c3 = 2, 8, 32
    y_pred3 = jax.random.normal(k5, (b3, s3, c3), dtype=jnp.float32)
    y_true3 = jax.random.randint(k6, (b3, s3), 0, c3, dtype=jnp.int32)
    loss3 = jax.block_until_ready(zero_one_loss(y_pred3, y_true3))
    ref3 = _reference(y_pred3, y_true3)
    assert jnp.allclose(loss3, ref3), (loss3, ref3)

    print("KERNEL_OK")
</pallas_src>

<mosaic_0001>
module attributes {stable_mosaic.version = 11 : i64} {
  func.func @_count_hits_kernel(%arg0: i32, %arg1: memref<8x256xf32, #tpu.memory_space<vmem>>, %arg2: memref<8x1xi32, #tpu.memory_space<vmem>>, %arg3: memref<1x1x128xf32, #tpu.memory_space<vmem>>) attributes {dimension_semantics = [#tpu.dimension_semantics<parallel>], iteration_bounds = array<i64: 2>, scalar_prefetch = 0 : i64, scratch_operands = 0 : i64, tpu.core_type = #tpu.core_type<tc>, window_params = [{transform_indices = @transform_0, window_bounds = array<i64: 8, 256>}, {transform_indices = @transform_1, window_bounds = array<i64: 8, 1>}, {transform_indices = @transform_2, window_bounds = array<i64: 1, 1, 128>}]} {
    %c0 = arith.constant 0 : index
    %c0_0 = arith.constant 0 : index
    %0 = vector.load %arg1[%c0, %c0_0] : memref<8x256xf32, #tpu.memory_space<vmem>>, vector<8x256xf32>
    %1 = arith.cmpf one, %0, %0 : vector<8x256xf32>
    %cst = arith.constant 0x7F800000 : f32
    %2 = vector.broadcast %cst : f32 to vector<8x256xf32>
    %3 = arith.select %1, %2, %0 : vector<8x256xi1>, vector<8x256xf32>
    %cst_1 = arith.constant dense<0xFF800000> : vector<8xf32>
    %4 = vector.multi_reduction <maximumf>, %3, %cst_1 [1] : vector<8x256xf32> to vector<8xf32>
    %5 = vector.shape_cast %4 : vector<8xf32> to vector<8x1xf32>
    %6 = tpu.iota {dimensions = array<i32: 1>} : vector<1x256xi32>
    %7 = vector.broadcast %5 : vector<8x1xf32> to vector<8x256xf32>
    %8 = arith.cmpf oeq, %3, %7 : vector<8x256xf32>
    %c256_i32 = arith.constant 256 : i32
    %9 = vector.shape_cast %6 : vector<1x256xi32> to vector<1x256xi32>
    %10 = vector.broadcast %9 : vector<1x256xi32> to vector<8x256xi32>
    %11 = vector.broadcast %c256_i32 : i32 to vector<8x256xi32>
    %12 = arith.select %8, %10, %11 : vector<8x256xi1>, vector<8x256xi32>
    %cst_2 = arith.constant dense<2147483647> : vector<8xi32>
    %13 = vector.multi_reduction <minsi>, %12, %cst_2 [1] : vector<8x256xi32> to vector<8xi32>
    %14 = vector.shape_cast %13 : vector<8xi32> to vector<8x1xi32>
    %c0_3 = arith.constant 0 : index
    %c0_4 = arith.constant 0 : index
    %15 = vector.load %arg2[%c0_3, %c0_4] : memref<8x1xi32, #tpu.memory_space<vmem>>, vector<8x1xi32>
    %16 = arith.cmpi eq, %14, %15 : vector<8x1xi32>
    %17 = arith.extui %16 : vector<8x1xi1> to vector<8x1xi32>
    %18 = arith.sitofp %17 : vector<8x1xi32> to vector<8x1xf32>
    %19 = vector.shape_cast %18 : vector<8x1xf32> to vector<1x8x1xf32>
    %cst_5 = arith.constant dense<0.000000e+00> : vector<1xf32>
    %20 = vector.multi_reduction <add>, %19, %cst_5 [1, 2] : vector<1x8x1xf32> to vector<1xf32>
    %21 = vector.shape_cast %20 : vector<1xf32> to vector<1x1x1xf32>
    %22 = vector.extract %21[0, 0, 0] : f32 from vector<1x1x1xf32>
    %23 = tpu.iota {dimensions = array<i32: 2>} : vector<1x1x128xi32>
    %c0_i32 = arith.constant 0 : i32
    %24 = vector.broadcast %c0_i32 : i32 to vector<1x1x128xi32>
    %25 = arith.cmpi eq, %23, %24 : vector<1x1x128xi32>
    %cst_6 = arith.constant 0.000000e+00 : f32
    %26 = vector.broadcast %22 : f32 to vector<1x1x128xf32>
    %27 = vector.broadcast %cst_6 : f32 to vector<1x1x128xf32>
    %28 = arith.select %25, %26, %27 : vector<1x1x128xi1>, vector<1x1x128xf32>
    %c0_7 = arith.constant 0 : index
    %c0_8 = arith.constant 0 : index
    %c0_9 = arith.constant 0 : index
    %29 = vector.load %arg3[%c0_7, %c0_8, %c0_9] : memref<1x1x128xf32, #tpu.memory_space<vmem>>, vector<1x1x128xf32>
    tpu.vector_store %arg3[%c0_7, %c0_8, %c0_9], %28 {strides = array<i32>} : memref<1x1x128xf32, #tpu.memory_space<vmem>>, vector<1x1x128xf32>,
    return
  }
  func.func @transform_0(%arg0: i32) -> (i32, i32) {
    %c0_i32 = arith.constant 0 : i32
    %c0_i32_0 = arith.constant 0 : i32
    return %arg0, %c0_i32 : i32, i32
  }
  func.func @transform_1(%arg0: i32) -> (i32, i32) {
    %c0_i32 = arith.constant 0 : i32
    %c0_i32_0 = arith.constant 0 : i32
    return %arg0, %c0_i32 : i32, i32
  }
  func.func @transform_2(%arg0: i32) -> (i32, i32, i32) {
    %c0_i32 = arith.constant 0 : i32
    %c0_i32_0 = arith.constant 0 : i32
    %c0_i32_1 = arith.constant 0 : i32
    return %arg0, %c0_i32, %c0_i32_0 : i32, i32, i32
  }
}

</mosaic_0001>

<llo_original>
// kernel: tpu_custom_call.1
$region0: #{tpu_custom_call.1}
  #allocation0 [shape = 'u32[]', space=smem, size = 0x4, offset = 0x4, fixed_abs, tag = 'smem constant byte address 0x4 - core index']
  #allocation1 [shape = 'u32[144,128]{1,0:T(1,128)}', space=vmem, size = 0x12000, scoped, tag = 'internal scratch']
  %s0 = inlined_call_operand.hbm [shape: f32[16,256], index: 0, kind: input, shape index: {}]
  %s1 = inlined_call_operand.vmem [shape: s32[16,1], index: 1, kind: input, shape index: {}]
  %s2 = inlined_call_operand.hbm [shape: f32[2,1,128], index: 2, kind: output, shape index: {}]
  %s3 = sld [smem:[#allocation0]]
  $region45: #{tpu_custom_call.1} parent=0
    _
  %s5 = ssub.s32 1, %s3
  %s6 = scalar_select 0, %s5, %s3
  $region1: #{tpu_custom_call.1} parent=0
    #allocation2 [shape = 'u8[16384]{0}', space=vmem, size = 0x4000, scoped, tag = 'input window, operand 0']
    #allocation3 [shape = 's32[2]{0}', space=sflag, size = 0x8, scoped, tag = 'scoped memory for tpu_custom_call.1']
    #allocation4 [shape = 's32[2]{0}', space=sflag, size = 0x8, scoped, tag = 'scoped memory for tpu_custom_call.1']
    #allocation5 [shape = 'u8[1024]{0}', space=vmem, size = 0x400, scoped, tag = 'output window, operand 0']
    %7 = vsyncpa [#allocation3], 0
    %s8 = scalar_lea.sflag [#allocation3], 1
    %9 = vsyncpa %s8, 0
    %10 = vsyncpa [#allocation4], 0
    %s11 = scalar_lea.sflag [#allocation4], 1
    %12 = vsyncpa %s11, 0
    loop: start=0, step=1, limit=4
    $region2: #{tpu_custom_call.1} parent=1 // loop_pre_header
      _
    $region3: #{tpu_custom_call.1} parent=1 // loop_header
      %s14 = sphi 0, %s18
      %p15 = scmp.ge.s32.totalorder %s14, 4
      %s24 = sphi 0, %s26
      %s27 = sphi 0, %s24
      %s28 = sphi 0, %s27
      %s44 = sphi 0, %s28
      %s50 = sphi 0, %s52
      %s53 = sphi 0, %s50
      %s54 = sphi 0, %s53
      %s70 = sphi 0, %s54
      %s76 = sphi 0, %s78
      %s79 = sphi 0, %s76
      %s80 = sphi 0, %s79
      %s96 = sphi 0, %s80
    $region4: #{tpu_custom_call.1} parent=1 // loop_header_branch
      %17 = sbr.rel (%p15) target = $region8
    $region5: #{tpu_custom_call.1} parent=1 // loop_body
      %s19 = ssub.s32 %s14, 1
      %s20 = ssub.s32 %s14, 2
      %s21 = sadd.s32 %s14, 1
      %s22 = ssub.s32 %s14, %s21
      %p23 = scmp.eq.s32.totalorder %s22, 0
      %s25 = sadd.s32 %s24, 1
      %s26 = scalar_select %p23, %s24, %s25
      %p29 = pneg %p23
      %p30 = scmp.eq.s32.totalorder %s14, 1
      %p31 = por %p29, %p30
      %p32 = scmp.ne.s32.totalorder %s24, %s27
      %p33 = scmp.eq.s32.totalorder %s14, 0
      %p34 = por %p32, %p33
      %p35 = scmp.ne.s32.totalorder %s24, %s27
      %p36 = scmp.eq.s32.totalorder %s19, 1
      %p37 = por %p35, %p36
      %p38 = scmp.ne.s32.totalorder %s27, %s28
      %p39 = scmp.eq.s32.totalorder %s19, 0
      %p40 = por %p38, %p39
      %p41 = scmp.ne.s32.totalorder %s27, %s28
      %p42 = scmp.eq.s32.totalorder %s20, 1
      %p43 = por %p41, %p42
      %p45 = scmp.ne.s32.totalorder %s28, %s44
      %p46 = scmp.eq.s32.totalorder %s20, 0
      %p47 = por %p45, %p46
      %s48 = ssub.s32 %s14, %s21
      %p49 = scmp.eq.s32.totalorder %s48, 0
      %s51 = sadd.s32 %s50, 1
      %s52 = scalar_select %p49, %s50, %s51
      %p55 = pneg %p49
      %p56 = scmp.eq.s32.totalorder %s14, 1
      %p57 = por %p55, %p56
      %p58 = scmp.ne.s32.totalorder %s50, %s53
      %p59 = scmp.eq.s32.totalorder %s14, 0
      %p60 = por %p58, %p59
      %p61 = scmp.ne.s32.totalorder %s50, %s53
      %p62 = scmp.eq.s32.totalorder %s19, 1
      %p63 = por %p61, %p62
      %p64 = scmp.ne.s32.totalorder %s53, %s54
      %p65 = scmp.eq.s32.totalorder %s19, 0
      %p66 = por %p64, %p65
      %p67 = scmp.ne.s32.totalorder %s53, %s54
      %p68 = scmp.eq.s32.totalorder %s20, 1
      %p69 = por %p67, %p68
      %p71 = scmp.ne.s32.totalorder %s54, %s70
      %p72 = scmp.eq.s32.totalorder %s20, 0
      %p73 = por %p71, %p72
      %s74 = ssub.s32 %s14, %s21
      %p75 = scmp.eq.s32.totalorder %s74, 0
      %s77 = sadd.s32 %s76, 1
      %s78 = scalar_select %p75, %s76, %s77
      %p81 = pneg %p75
      %p82 = scmp.eq.s32.totalorder %s14, 1
      %p83 = por %p81, %p82
      %p84 = scmp.ne.s32.totalorder %s76, %s79
      %p85 = scmp.eq.s32.totalorder %s14, 0
      %p86 = por %p84, %p85
      %p87 = scmp.ne.s32.totalorder %s76, %s79
      %p88 = scmp.eq.s32.totalorder %s19, 1
      %p89 = por %p87, %p88
      %p90 = scmp.ne.s32.totalorder %s79, %s80
      %p91 = scmp.eq.s32.totalorder %s19, 0
      %p92 = por %p90, %p91
      %p93 = scmp.ne.s32.totalorder %s79, %s80
      %p94 = scmp.eq.s32.totalorder %s20, 1
      %p95 = por %p93, %p94
      %p97 = scmp.ne.s32.totalorder %s80, %s96
      %p98 = scmp.eq.s32.totalorder %s20, 0
      %p99 = por %p97, %p98
      %p100 = scmp.le.s32.totalorder 1, %s14
      %p101 = scmp.lt.s32.totalorder %s14, 3
      %p102 = pnand %p100, %p101
      %p103 = pneg %p102
      // Predicated region
      $region9: #{tpu_custom_call.1} parent=5 // pred_check
        _
      $region10: #{tpu_custom_call.1} parent=5 // pred_check_branch
        %105 = sbr.rel (%p102) target = $region12
      $region11: #{tpu_custom_call.1} parent=5 // pred_region
        %s106 = ssub.s32 %s14, 1
      $region12: #{tpu_custom_call.1} parent=5 // pred_fallthru
        _
      %p107 = scmp.lt.s32.totalorder %s14, 2
      // Predicated region
      $region13: #{tpu_custom_call.1} parent=5 // pred_check
        %p108 = pneg %p107
      $region14: #{tpu_custom_call.1} parent=5 // pred_check_branch
        %110 = sbr.rel (%p108) target = $region16
      $region15: #{tpu_custom_call.1} parent=5 // pred_region
        // Predicated region
        $region17: #{tpu_custom_call.1} parent=15 // pred_check
          %p111 = pneg %p34
        $region18: #{tpu_custom_call.1} parent=15 // pred_check_branch
          %113 = sbr.rel (%p111) target = $region20
        $region19: #{tpu_custom_call.1} parent=15 // pred_region
          %s114 = sand.u32 %s24, 1
          %s115 = scalar_lea.sflag [#allocation3], %s114
          %s116 = sand.u32 %s24, 1
          %s117 = smul.addr %s116, 16
          %s118 = scalar_lea.vmem [#allocation2], %s117
          %s120 = ssub.s32 256, 256
          %121 = vsyncadd %s115, %s120
          %s122 = smul.addr %s14, 2
          %s123 = smul.addr %s122, 128
          %s124 = scalar_lea.hbm %s0, %s123
          %s126 = sshll.u32 %s118, 4
          %s127 = int_to_ptr.vmem [resolvable:$true] %s126
          %129 = dma.hbm_to_vmem [thread:$0]  %s124, 256, %s127, %s115
        $region20: #{tpu_custom_call.1} parent=15 // pred_fallthru
          _
        // Predicated region
        $region21: #{tpu_custom_call.1} parent=15 // pred_check
          %p130 = pneg %p60
        $region22: #{tpu_custom_call.1} parent=15 // pred_check_branch
          %132 = sbr.rel (%p130) target = $region24
        $region23: #{tpu_custom_call.1} parent=15 // pred_region
          %p133 = scmp.lt.s32.totalorder %s14, 1
          %s134 = scalar_select %p133, %s14, 1
          %s135 = smul.addr %s134, 8
          %s136 = scalar_lea.vmem %s1, %s135
        $region24: #{tpu_custom_call.1} parent=15 // pred_fallthru
          _
      $region16: #{tpu_custom_call.1} parent=5 // pred_fallthru
        _
      %p137 = scmp.le.s32.totalorder 1, %s14
      %p138 = scmp.lt.s32.totalorder %s14, 3
      %p139 = pnand %p137, %p138
      %p140 = pneg %p139
      // Predicated region
      $region25: #{tpu_custom_call.1} parent=5 // pred_check
        _
      $region26: #{tpu_custom_call.1} parent=5 // pred_check_branch
        %142 = sbr.rel (%p139) target = $region28
      $region27: #{tpu_custom_call.1} parent=5 // pred_region
        %s143 = ssub.s32 %s14, 1
        %s144 = sand.u32 %s27, 1
        %s145 = scalar_lea.sflag [#allocation3], %s144
        %s146 = sand.u32 %s27, 1
        %s147 = smul.addr %s146, 16
        %s148 = scalar_lea.vmem [#allocation2], %s147
        // Predicated region
        $region29: #{tpu_custom_call.1} parent=27 // pred_check
          %p149 = pneg %p40
        $region30: #{tpu_custom_call.1} parent=27 // pred_check_branch
          %151 = sbr.rel (%p149) target = $region32
        $region31: #{tpu_custom_call.1} parent=27 // pred_region
          %152 = dma.done %s145, 256
        $region32: #{tpu_custom_call.1} parent=27 // pred_fallthru
          _
        %s153 = sand.u32 %s27, 1
        %s154 = scalar_lea.sflag [#allocation3], %s153
        %s155 = sand.u32 %s27, 1
        %s156 = smul.addr %s155, 16
        %s157 = scalar_lea.vmem [#allocation2], %s156
        %p158 = pneg %p40
        %p159 = pneg %p37
        %p160 = scmp.lt.s32.totalorder %s19, 1
        %s161 = scalar_select %p160, %s19, 1
        %s162 = smul.addr %s161, 8
        %s163 = scalar_lea.vmem %s1, %s162
        %p164 = pneg %p66
        %p165 = pneg %p63
        %p166 = pneg %p92
        %p167 = pneg %p89
        %s168 = sand.u32 %s79, 1
        %s169 = scalar_lea.sflag [#allocation4], %s168
        %s170 = sand.u32 %s79, 1
        %s171 = scalar_lea.vmem [#allocation5], %s170
        %p172 = scmp.lt.s32.totalorder %s19, 1
        %s173 = scalar_select %p172, %s19, 1
        %s174 = smul.addr %s173, 8
        %s175 = scalar_lea.vmem %s1, %s174
        %v176 = vld [vmem:[%s148] sm:$0xff]
        %v177 = vld [vmem:[%s148 + $0x8] sm:$0xff]
        %vm178 = vcmp.ne.f32.partialorder %v176, %v176
        %vm179 = vcmp.ne.f32.partialorder %v177, %v177
        %v180 = vsel %vm178, inf, %v176
        %v181 = vsel %vm179, inf, %v177
        %v182 = vmax.f32 %v180, %v181
        %183 = vmax.xlane.f32.xlu0 %v182
        %v184 = vpop.xlane.xlu0 %183
        %v185 = vlaneseq
        %v186 = vand.u32 %v185, 127
        %v187 = vadd.s32 %v186, 128
        %vm188 = vcmp.eq.f32.partialorder %v180, %v184
        %vm189 = vcmp.eq.f32.partialorder %v181, %v184
        %v190 = vsel %vm188, %v186, 256
        %v191 = vsel %vm189, %v187, 256
        %vm192 = vcmp.lt.s32.totalorder %v190, %v191
        %v193 = vsel %vm192, %v190, %v191
        %v194 = vand.u32 %v193, 65535
        %v195 = vshra.s32 %v193, 16
        %v196 = vcvt.s32.f32 %v194
        %v197 = vcvt.s32.f32 %v195
        %198 = vmin.xlane.f32.xlu0 %v197
        %v199 = vpop.xlane.xlu0 %198
        %vm200 = vcmp.eq.f32.partialorder %v197, %v199
        %v201 = vsel %vm200, %v196, inf
        %202 = vmin.xlane.f32.xlu0 %v201
        %v203 = vpop.xlane.xlu0 %202
        %v204 = vcvt.f32.s32 %v203
        %v205 = vcvt.f32.s32 %v199
        %v206 = vshll.u32 %v205, 16
        %v207 = vadd.s32 %v206, %v204
        %v208 = vld [vmem:[%s175] sm:$0xff]
        %vm209 = vcmp.eq.s32.totalorder %v207, %v208
        %v210 = vsel %vm209, 1, 0
        %v211 = vcvt.s32.f32 %v210
        %vm212 = vcmask 7168
        %v213 = vsel %vm212, %v211, 0.0
        %214 = vadd.xlane.f32.xlu0 %v213
        %v215 = vpop.xlane.xlu0 %214
        %v216 = vrot.slane %v215, 4
        %v217 = vadd.f32 %v215, %v216
        %v218 = vrot.slane %v217, 2
        %v219 = vadd.f32 %v217, %v218
        %v220 = vrot.slane %v219, 1
        %v221 = vadd.f32 %v219, %v220
        %s222 = vtos %v221
        %vm223 = vcmp.eq.s32.totalorder %v186, 0
        %v224 = vstv %s222
        %v225 = vsel %vm223, %v224, 0.0
        %226 = vst [vmem:[%s171] sm:$0x1] %v225
        %s227 = sand.u32 %s79, 1
        %s228 = scalar_lea.sflag [#allocation4], %s227
        %s229 = sand.u32 %s79, 1
        %s230 = scalar_lea.vmem [#allocation5], %s229
        // Predicated region
        $region33: #{tpu_custom_call.1} parent=27 // pred_check
          %p231 = pneg %p89
        $region34: #{tpu_custom_call.1} parent=27 // pred_check_branch
          %233 = sbr.rel (%p231) target = $region36
        $region35: #{tpu_custom_call.1} parent=27 // pred_region
          %s235 = ssub.s32 16, 16
          %236 = vsyncadd %s228, %s235
          %s237 = smul.addr %s19, 16
          %s238 = scalar_lea.hbm %s2, %s237
          %s240 = sshll.u32 %s230, 4
          %s241 = int_to_ptr.vmem [resolvable:$true] %s240
          %243 = dma.vmem_to_hbm [thread:$0]  %s241, 16, %s238, %s228
        $region36: #{tpu_custom_call.1} parent=27 // pred_fallthru
          _
      $region28: #{tpu_custom_call.1} parent=5 // pred_fallthru
        _
      %p244 = scmp.le.s32.totalorder 2, %s14
      // Predicated region
      $region37: #{tpu_custom_call.1} parent=5 // pred_check
        %p245 = pneg %p244
      $region38: #{tpu_custom_call.1} parent=5 // pred_check_branch
        %247 = sbr.rel (%p245) target = $region40
      $region39: #{tpu_custom_call.1} parent=5 // pred_region
        %s248 = ssub.s32 %s14, 2
        // Predicated region
        $region41: #{tpu_custom_call.1} parent=39 // pred_check
          %p249 = pneg %p95
        $region42: #{tpu_custom_call.1} parent=39 // pred_check_branch
          %251 = sbr.rel (%p249) target = $region44
        $region43: #{tpu_custom_call.1} parent=39 // pred_region
          %s252 = sand.u32 %s80, 1
          %s253 = scalar_lea.sflag [#allocation4], %s252
          %s254 = sand.u32 %s80, 1
          %s255 = scalar_lea.vmem [#allocation5], %s254
          %256 = dma.done %s253, 16
        $region44: #{tpu_custom_call.1} parent=39 // pred_fallthru
          _
      $region40: #{tpu_custom_call.1} parent=5 // pred_fallthru
        _
    $region6: #{tpu_custom_call.1} parent=1 // loop_footer
      %s18 = sadd.s32 1, %s14
    $region7: #{tpu_custom_call.1} parent=1 // loop_footer_branch
      %13 = sbr.rel target = $region3
    $region8: #{tpu_custom_call.1} parent=1 // loop_exit
      _
    %257 = vsyncpa [#allocation3], 1
    %s258 = scalar_lea.sflag [#allocation3], 1
    %259 = vsyncpa %s258, 1
    %260 = vsyncpa [#allocation4], 1
    %s261 = scalar_lea.sflag [#allocation4], 1
    %262 = vsyncpa %s261, 1

</llo_original>
